<compile_context>
chip_gen: v7x
topology: tpu7x:2x2x1
jax: 0.10.0
libtpu: 0.0.40
codegen_flags: <defaults>
</compile_context>

<pallas_src>
import functools

import jax
import jax.numpy as jnp
import numpy as np
from jax.experimental import pallas as pl
from jax.experimental.pallas import tpu as pltpu


def _round_up(x, m):
    return ((x + m - 1) // m) * m


def _proto_sim_kernel(scaler_ref, test_ref, sup_t_ref, ids_ref, label_t_ref,
                      out_ref, *, ones_lane):
    # Refs (per grid step, Bb = batch elements per block):
    #   scaler_ref : (1,)              f32   (SMEM)
    #   test_ref   : (Bb, S, T, Dp)    bf16/f32  (D zero-padded to Dp)
    #   sup_t_ref  : (Bb, Dp, SL)      bf16/f32  (row `ones_lane` == 1.0 count row)
    #   ids_ref    : (Bb, SL, 1)       int32     (-1 == no tag)
    #   label_t_ref: (Bb, Dp, NTp)     bf16/f32  (transposed; zero "O" col + pads baked in)
    #   out_ref    : (Bb, T, NTp)      f32
    Bb, S, T, Dp = test_ref.shape
    SL = sup_t_ref.shape[2]
    NTp = label_t_ref.shape[2]

    scaler = scaler_ref[0]          # runtime f32 scalar
    inv_s = 1.0 / S                 # static

    sup_t = sup_t_ref[...]          # (Bb, Dp, SL)
    ids = ids_ref[...]              # (Bb, SL, 1)

    # One-hot rebuilt on-chip, lane-dense on NTp, single select+cast, kept only
    # in the MXU operand dtype (no f32 copy).
    tag_iota = jax.lax.broadcasted_iota(jnp.int32, (Bb, SL, NTp), 2)
    onehot = jnp.where(tag_iota == ids, 1.0, 0.0).astype(sup_t.dtype)  # (Bb, SL, NTp)

    # sum_reps_t[b, d, n] = sum_sl sup_t[b, d, sl] * onehot[b, sl, n]
    # Standard K-major A@B on the MXU; f32 accumulation.  Row `ones_lane`
    # (the 1.0 row injected wrapper-side) gives tag_count exactly.
    sum_reps_t = jax.lax.dot_general(
        sup_t, onehot,
        dimension_numbers=(((2,), (1,)), ((0,), (0,))),
        preferred_element_type=jnp.float32)                 # (Bb, Dp, NTp)

    if ones_lane is not None:
        tag_count = sum_reps_t[:, ones_lane:ones_lane + 1, :]   # (Bb, 1, NTp) f32
    else:
        # D already 128-aligned: no spare pad row -> one tiny extra MXU pass.
        ones_row = jnp.ones((Bb, 1, SL), sup_t.dtype)
        tag_count = jax.lax.dot_general(
            ones_row, onehot,
            dimension_numbers=(((2,), (1,)), ((0,), (0,))),
            preferred_element_type=jnp.float32)                 # (Bb, 1, NTp)

    # Fused scale/blend (O(NTp) divide instead of O(NTp*Dp)); the 1/S of the
    # test mean is folded in so no extra pass over the test block is needed:
    #   sim = (sum_s test[s]) @ ( (1-scaler)/(S*(count+1e-4)) * sum_reps_t
    #                             + (scaler/S) * label_t )
    inv = (1.0 - scaler) * inv_s / (tag_count + 1e-4)           # (Bb, 1, NTp) f32
    proto_t = (sum_reps_t * inv
               + (scaler * inv_s) * label_t_ref[...].astype(jnp.float32))  # (Bb, Dp, NTp)

    # Sum of test reps over the support-set axis with f32 accumulation, slice
    # by slice (no full-block f32 materialization).
    test = test_ref[...]                                        # (Bb, S, T, Dp)
    test_sum = test[:, 0].astype(jnp.float32)
    for s in range(1, S):
        test_sum = test_sum + test[:, s].astype(jnp.float32)    # (Bb, T, Dp) f32

    # sim[b, t, n] = sum_d test_sum[b,t,d] * proto_t[b,d,n]  — standard A@B,
    # output lane-dense on NTp.
    sim = jax.lax.dot_general(
        test_sum, proto_t,
        dimension_numbers=(((2,), (1,)), ((0,), (0,))),
        preferred_element_type=jnp.float32)                     # (Bb, T, NTp)
    out_ref[...] = sim.astype(out_ref.dtype)


def proto_with_label_similarity(test_reps, support_reps, test_output_mask,
                                support_output_mask, support_targets,
                                label_reps, scaler, *, block_b=None):
    """Pallas wrapper. Masks are accepted but unused (as in the PyTorch forward).

    support_targets must be strictly one-hot (or all-zero) along the last axis.
    """
    del test_output_mask, support_output_mask  # not used by this scorer
    B, S, T, D = test_reps.shape
    L = support_reps.shape[2]
    NT = support_targets.shape[3]
    SL = S * L

    NTp = _round_up(NT, 128)                   # lane-dense proto / output N dim
    Dp = _round_up(D, 128)                     # lane-dense reps dim
    ones_lane = D if Dp > D else None          # spare row for the count fold

    # --- compact id encoding of the one-hot targets (exact for one-hot or
    #     all-zero rows; -1 means "no tag" and matches nothing in-kernel).
    tgt_max = jnp.max(support_targets, axis=-1)
    tgt_ids = jnp.where(tgt_max > 0,
                        jnp.argmax(support_targets, axis=-1),
                        -1).astype(jnp.int32)                    # (B, S, L)
    tgt_ids = tgt_ids.reshape(B, SL, 1)

    # --- support reps transposed to (B, Dp, SL); pad rows are zero except the
    #     ones row at `ones_lane` which yields tag_count from the MXU pass.
    sup_t = jnp.swapaxes(support_reps.reshape(B, SL, D), 1, 2)   # (B, D, SL)
    if Dp > D:
        pad_rows = jnp.zeros((B, Dp - D, SL), sup_t.dtype)
        pad_rows = pad_rows.at[:, 0, :].set(1.0)                 # row D = count row
        sup_t = jnp.concatenate([sup_t, pad_rows], axis=1)       # (B, Dp, SL)

    # --- test reps zero-padded on the lane (D) axis.
    test_p = test_reps if Dp == D else jnp.pad(
        test_reps, ((0, 0), (0, 0), (0, 0), (0, Dp - D)))

    # --- label tensor, pre-transposed to (B, Dp, NTp): zero "O" column at
    #     n=0, zero padding elsewhere (so matmul 2 needs no in-kernel transpose).
    label_t = jnp.zeros((B, Dp, NTp), dtype=label_reps.dtype)
    label_t = label_t.at[:, :D, 1:NT].set(jnp.swapaxes(label_reps, 1, 2))

    # --- runtime scaler as an SMEM scalar (not baked at trace time).
    scaler_arr = jnp.asarray(scaler, dtype=jnp.float32).reshape(1)

    # --- per-batch-element VMEM accounting: DMA'd blocks (double-buffered)
    #     plus in-kernel intermediates, with VMEM (8,128) tile padding.
    isz_t = test_reps.dtype.itemsize
    isz_s = support_reps.dtype.itemsize
    isz_l = label_reps.dtype.itemsize
    sl_lane = _round_up(SL, 128)
    sl_sub = _round_up(SL, 8)
    t_sub = _round_up(T, 8)
    per_b_dma = (S * T * Dp * isz_t            # test block
                 + Dp * sl_lane * isz_s        # transposed support block
                 + sl_sub * 128 * 4            # tag-id block
                 + Dp * NTp * isz_l            # transposed label block
                 + t_sub * NTp * 4)            # output block
    per_b_tmp = (sl_sub * NTp * isz_s          # one-hot
                 + 3 * Dp * NTp * 4            # sum_reps_t / proto_t / label f32
                 + t_sub * Dp * 4              # test_sum
                 + t_sub * NTp * 4)            # sim
    per_b_bytes = 2 * per_b_dma + per_b_tmp    # double-buffer DMA'd blocks

    # --- generation-aware VMEM budget.
    try:
        vmem_cap = int(pltpu.get_tpu_info().vmem_capacity_bytes)
    except Exception:
        vmem_cap = 64 * 1024 * 1024            # conservative fallback
    if vmem_cap <= 64 * 1024 * 1024:           # v7x-class: 64 MiB / TensorCore
        budget = 20 * 1024 * 1024
        vmem_cap_limit = 48 * 1024 * 1024
    else:                                      # v5e / v6e: 128 MiB
        budget = 40 * 1024 * 1024
        vmem_cap_limit = 96 * 1024 * 1024

    # --- pick how many batch elements to process per grid step.
    if block_b is None:
        block_b = 1
        for cand in range(1, B + 1):
            if B % cand == 0 and cand * per_b_bytes <= budget:
                block_b = cand
        if B >= 2:
            block_b = min(block_b, B // 2)     # keep >=2 grid steps (megacore)
            while B % block_b != 0:
                block_b -= 1
    if B % block_b != 0:
        raise ValueError(f"block_b={block_b} must divide batch size {B}")
    grid = (B // block_b,)

    vmem_limit = int(min(max(block_b * per_b_bytes + (4 << 20), 32 * 1024 * 1024),
                         vmem_cap_limit))

    kernel = functools.partial(_proto_sim_kernel, ones_lane=ones_lane)

    out = pl.pallas_call(
        kernel,
        out_shape=jax.ShapeDtypeStruct((B, T, NTp), jnp.float32),
        grid_spec=pltpu.PrefetchScalarGridSpec(
            num_scalar_prefetch=0,
            grid=grid,
            in_specs=[
                pl.BlockSpec(memory_space=pltpu.MemorySpace.SMEM),         # scaler (1,)
                pl.BlockSpec((block_b, S, T, Dp), lambda b: (b, 0, 0, 0)),  # test reps
                pl.BlockSpec((block_b, Dp, SL), lambda b: (b, 0, 0)),       # support reps^T
                pl.BlockSpec((block_b, SL, 1), lambda b: (b, 0, 0)),        # tag ids
                pl.BlockSpec((block_b, Dp, NTp), lambda b: (b, 0, 0)),      # label reps^T
            ],
            out_specs=pl.BlockSpec((block_b, T, NTp), lambda b: (b, 0, 0)),
        ),
        compiler_params=pltpu.CompilerParams(
            dimension_semantics=("parallel",),
            vmem_limit_bytes=vmem_limit),
    )(scaler_arr, test_p, sup_t, tgt_ids, label_t)

    return out[:, :, :NT]


def _reference(test_reps, support_reps, support_targets, label_reps, scaler):
    """Pure-JAX reference mirroring the PyTorch code (f32 math), for checking."""
    test_f = test_reps.astype(jnp.float32)
    sup_f = support_reps.astype(jnp.float32)
    lab_f = label_reps.astype(jnp.float32)
    tgt = support_targets.astype(jnp.float32)

    sum_reps = jnp.einsum('bsln,bsld->bnd', tgt, sup_f)
    tag_count = jnp.einsum('bsln->bn', tgt)[..., None] + 1e-4
    proto = sum_reps / tag_count
    label_full = jnp.concatenate(
        [jnp.zeros_like(lab_f[:, :1, :]), lab_f], axis=1)
    proto = (1.0 - scaler) * proto + scaler * label_full
    test_mean = jnp.mean(test_f, axis=1)
    return jnp.einsum('btd,bnd->btn', test_mean, proto)


if __name__ == "__main__":
    # Small deterministic shapes.
    B, S, T, L, D, NT = 2, 2, 8, 8, 32, 5
    scaler = 0.3

    key = jax.random.PRNGKey(0)
    k1, k2, k3, k4 = jax.random.split(key, 4)

    # bf16 activations (native MXU input width); accumulation stays f32.
    test_reps = jax.random.normal(k1, (B, S, T, D), dtype=jnp.float32).astype(jnp.bfloat16)
    support_reps = jax.random.normal(k2, (B, S, L, D), dtype=jnp.float32).astype(jnp.bfloat16)
    # one-hot support targets (module-parity input; wrapper re-encodes as ids)
    tgt_ids = jax.random.randint(k3, (B, S, L), 0, NT)
    support_targets = jax.nn.one_hot(tgt_ids, NT, dtype=jnp.float32)
    # label reps for the NT-1 non-pad tags (a zero row is prepended in forward)
    label_reps = jax.random.normal(k4, (B, NT - 1, D), dtype=jnp.float32).astype(jnp.bfloat16)
    # masks (unused by this scorer's forward, kept for signature parity)
    test_output_mask = jnp.ones((B, T), dtype=jnp.float32)
    support_output_mask = jnp.ones((B, S, L), dtype=jnp.float32)

    out = proto_with_label_similarity(
        test_reps, support_reps, test_output_mask, support_output_mask,
        support_targets, label_reps, scaler)
    out = jax.block_until_ready(out)

    ref = _reference(test_reps, support_reps, support_targets, label_reps, scaler)
    np.testing.assert_allclose(np.asarray(out), np.asarray(ref),
                               rtol=1e-4, atol=1e-4)

    # TODO(synk): emb_log embedding dump (host file I/O during eval) has no Pallas equivalent.
    print("KERNEL_OK")
</pallas_src>

<mosaic_0001>
module attributes {stable_mosaic.version = 11 : i64} {
  func.func @_proto_sim_kernel(%arg0: i32, %arg1: memref<1xf32, #tpu.memory_space<smem>>, %arg2: memref<1x2x8x128xbf16, #tpu.memory_space<vmem>>, %arg3: memref<1x128x16xbf16, #tpu.memory_space<vmem>>, %arg4: memref<1x16x1xi32, #tpu.memory_space<vmem>>, %arg5: memref<1x128x128xbf16, #tpu.memory_space<vmem>>, %arg6: memref<1x8x128xf32, #tpu.memory_space<vmem>>) attributes {dimension_semantics = [#tpu.dimension_semantics<parallel>], iteration_bounds = array<i64: 2>, scalar_prefetch = 0 : i64, scratch_operands = 0 : i64, tpu.core_type = #tpu.core_type<tc>, window_params = [{transform_indices = @transform_0, window_bounds = array<i64: 1>}, {transform_indices = @transform_1, window_bounds = array<i64: 1, 2, 8, 128>}, {transform_indices = @transform_2, window_bounds = array<i64: 1, 128, 16>}, {transform_indices = @transform_3, window_bounds = array<i64: 1, 16, 1>}, {transform_indices = @transform_4, window_bounds = array<i64: 1, 128, 128>}, {transform_indices = @transform_5, window_bounds = array<i64: 1, 8, 128>}]} {
    %c0 = arith.constant 0 : index
    %0 = memref.load %arg1[%c0] : memref<1xf32, #tpu.memory_space<smem>>
    %c0_0 = arith.constant 0 : index
    %c0_1 = arith.constant 0 : index
    %c0_2 = arith.constant 0 : index
    %1 = vector.load %arg3[%c0_0, %c0_1, %c0_2] : memref<1x128x16xbf16, #tpu.memory_space<vmem>>, vector<1x128x16xbf16>
    %c0_3 = arith.constant 0 : index
    %c0_4 = arith.constant 0 : index
    %c0_5 = arith.constant 0 : index
    %2 = vector.load %arg4[%c0_3, %c0_4, %c0_5] : memref<1x16x1xi32, #tpu.memory_space<vmem>>, vector<1x16x1xi32>
    %3 = tpu.iota {dimensions = array<i32: 2>} : vector<1x16x128xi32>
    %4 = vector.broadcast %2 : vector<1x16x1xi32> to vector<1x16x128xi32>
    %5 = arith.cmpi eq, %3, %4 : vector<1x16x128xi32>
    %cst = arith.constant 1.000000e+00 : f32
    %cst_6 = arith.constant 0.000000e+00 : f32
    %6 = vector.broadcast %cst : f32 to vector<1x16x128xf32>
    %7 = vector.broadcast %cst_6 : f32 to vector<1x16x128xf32>
    %8 = arith.select %5, %6, %7 : vector<1x16x128xi1>, vector<1x16x128xf32>
    %9 = arith.truncf %8 : vector<1x16x128xf32> to vector<1x16x128xbf16>
    %cst_7 = arith.constant dense<0.000000e+00> : vector<1x128x128xf32>
    %10 = tpu.matmul %1, %9, %cst_7 {dimension_numbers = #tpu.dot_dimension_numbers<[2], [1], [1], [2], [0, 0, 0, 1, 1, 2], [0], [0]>} : vector<1x128x16xbf16>, vector<1x16x128xbf16>, vector<1x128x128xf32> -> vector<1x128x128xf32>
    %11 = vector.extract_strided_slice %10 {offsets = [0, 32, 0], sizes = [1, 1, 128], strides = [1, 1, 1]} : vector<1x128x128xf32> to vector<1x1x128xf32>
    %cst_8 = arith.constant 1.000000e+00 : f32
    %12 = arith.subf %cst_8, %0 : f32
    %cst_9 = arith.constant 5.000000e-01 : f32
    %13 = arith.mulf %12, %cst_9 : f32
    %cst_10 = arith.constant 9.99999974E-5 : f32
    %14 = vector.broadcast %cst_10 : f32 to vector<1x1x128xf32>
    %15 = arith.addf %11, %14 : vector<1x1x128xf32>
    %16 = vector.broadcast %13 : f32 to vector<1x1x128xf32>
    %17 = arith.divf %16, %15 : vector<1x1x128xf32>
    %18 = vector.broadcast %17 : vector<1x1x128xf32> to vector<1x128x128xf32>
    %19 = arith.mulf %10, %18 : vector<1x128x128xf32>
    %cst_11 = arith.constant 5.000000e-01 : f32
    %20 = arith.mulf %0, %cst_11 : f32
    %c0_12 = arith.constant 0 : index
    %c0_13 = arith.constant 0 : index
    %c0_14 = arith.constant 0 : index
    %21 = vector.load %arg5[%c0_12, %c0_13, %c0_14] : memref<1x128x128xbf16, #tpu.memory_space<vmem>>, vector<1x128x128xbf16>
    %22 = arith.extf %21 : vector<1x128x128xbf16> to vector<1x128x128xf32>
    %23 = vector.broadcast %20 : f32 to vector<1x128x128xf32>
    %24 = arith.mulf %23, %22 : vector<1x128x128xf32>
    %25 = arith.addf %19, %24 : vector<1x128x128xf32>
    %c0_15 = arith.constant 0 : index
    %c0_16 = arith.constant 0 : index
    %c0_17 = arith.constant 0 : index
    %c0_18 = arith.constant 0 : index
    %26 = vector.load %arg2[%c0_15, %c0_16, %c0_17, %c0_18] : memref<1x2x8x128xbf16, #tpu.memory_space<vmem>>, vector<1x2x8x128xbf16>
    %27 = vector.extract_strided_slice %26 {offsets = [0, 0, 0, 0], sizes = [1, 1, 8, 128], strides = [1, 1, 1, 1]} : vector<1x2x8x128xbf16> to vector<1x1x8x128xbf16>
    %28 = vector.shape_cast %27 : vector<1x1x8x128xbf16> to vector<1x8x128xbf16>
    %29 = arith.extf %28 : vector<1x8x128xbf16> to vector<1x8x128xf32>
    %30 = vector.extract_strided_slice %26 {offsets = [0, 1, 0, 0], sizes = [1, 1, 8, 128], strides = [1, 1, 1, 1]} : vector<1x2x8x128xbf16> to vector<1x1x8x128xbf16>
    %31 = vector.shape_cast %30 : vector<1x1x8x128xbf16> to vector<1x8x128xbf16>
    %32 = arith.extf %31 : vector<1x8x128xbf16> to vector<1x8x128xf32>
    %33 = arith.addf %29, %32 : vector<1x8x128xf32>
    %cst_19 = arith.constant dense<0.000000e+00> : vector<1x8x128xf32>
    %34 = tpu.matmul %33, %25, %cst_19 {dimension_numbers = #tpu.dot_dimension_numbers<[2], [1], [1], [2], [0, 0, 0, 1, 1, 2], [0], [0]>} : vector<1x8x128xf32>, vector<1x128x128xf32>, vector<1x8x128xf32> -> vector<1x8x128xf32>
    %c0_20 = arith.constant 0 : index
    %c0_21 = arith.constant 0 : index
    %c0_22 = arith.constant 0 : index
    %35 = vector.load %arg6[%c0_20, %c0_21, %c0_22] : memref<1x8x128xf32, #tpu.memory_space<vmem>>, vector<1x8x128xf32>
    tpu.vector_store %arg6[%c0_20, %c0_21, %c0_22], %34 {strides = array<i32>} : memref<1x8x128xf32, #tpu.memory_space<vmem>>, vector<1x8x128xf32>,
    return
  }
  func.func @transform_0(%arg0: i32) -> i32 {
    %c0_i32 = arith.constant 0 : i32
    %c0_i32_0 = arith.constant 0 : i32
    return %c0_i32 : i32
  }
  func.func @transform_1(%arg0: i32) -> (i32, i32, i32, i32) {
    %c0_i32 = arith.constant 0 : i32
    %c0_i32_0 = arith.constant 0 : i32
    %c0_i32_1 = arith.constant 0 : i32
    %c0_i32_2 = arith.constant 0 : i32
    return %arg0, %c0_i32, %c0_i32_0, %c0_i32_1 : i32, i32, i32, i32
  }
  func.func @transform_2(%arg0: i32) -> (i32, i32, i32) {
    %c0_i32 = arith.constant 0 : i32
    %c0_i32_0 = arith.constant 0 : i32
    %c0_i32_1 = arith.constant 0 : i32
    return %arg0, %c0_i32, %c0_i32_0 : i32, i32, i32
  }
  func.func @transform_3(%arg0: i32) -> (i32, i32, i32) {
    %c0_i32 = arith.constant 0 : i32
    %c0_i32_0 = arith.constant 0 : i32
    %c0_i32_1 = arith.constant 0 : i32
    return %arg0, %c0_i32, %c0_i32_0 : i32, i32, i32
  }
  func.func @transform_4(%arg0: i32) -> (i32, i32, i32) {
    %c0_i32 = arith.constant 0 : i32
    %c0_i32_0 = arith.constant 0 : i32
    %c0_i32_1 = arith.constant 0 : i32
    return %arg0, %c0_i32, %c0_i32_0 : i32, i32, i32
  }
  func.func @transform_5(%arg0: i32) -> (i32, i32, i32) {
    %c0_i32 = arith.constant 0 : i32
    %c0_i32_0 = arith.constant 0 : i32
    %c0_i32_1 = arith.constant 0 : i32
    return %arg0, %c0_i32, %c0_i32_0 : i32, i32, i32
  }
}

</mosaic_0001>

<llo_original>
// kernel: tpu_custom_call.1
$region0: #{tpu_custom_call.1}
  #allocation0 [shape = 'u32[]', space=smem, size = 0x4, offset = 0x4, fixed_abs, tag = 'smem constant byte address 0x4 - core index']
  #allocation1 [shape = 'u32[144,128]{1,0:T(1,128)}', space=vmem, size = 0x12000, scoped, tag = 'internal scratch']
  #allocation2 [shape = 'f32[1]{0:T(128)S(6)}', space=smem, size = 0x200, scoped, tag = 'scoped memory for tpu_custom_call.1']
  %s0 = inlined_call_operand.<no memory space> [shape: f32[1], index: 0, kind: input, shape index: {}]
  %s1 = inlined_call_operand.vmem [shape: bf16[2,2,8,128], index: 1, kind: input, shape index: {}]
  %s2 = inlined_call_operand.vmem [shape: bf16[2,128,16], index: 2, kind: input, shape index: {}]
  %s3 = inlined_call_operand.vmem [shape: s32[2,16,1], index: 3, kind: input, shape index: {}]
  %s4 = inlined_call_operand.vmem [shape: bf16[2,128,128], index: 4, kind: input, shape index: {}]
  %s5 = inlined_call_operand.hbm [shape: f32[2,8,128], index: 5, kind: output, shape index: {}]
  %s6 = sld [smem:[#allocation0]]
  $region53: #{tpu_custom_call.1} parent=0
    _
  %s8 = ssub.s32 1, %s6
  %s9 = scalar_select 0, %s8, %s6
  %10 = sst [smem:[#allocation2]] %s0
  $region1: #{tpu_custom_call.1} parent=0
    #allocation3 [shape = 'u8[8192]{0}', space=vmem, size = 0x2000, scoped, tag = 'output window, operand 0']
    #allocation4 [shape = 's32[2]{0}', space=sflag, size = 0x8, scoped, tag = 'scoped memory for tpu_custom_call.1']
    %11 = vsyncpa [#allocation4], 0
    %s12 = scalar_lea.sflag [#allocation4], 1
    %13 = vsyncpa %s12, 0
    loop: start=0, step=1, limit=4
    $region2: #{tpu_custom_call.1} parent=1 // loop_pre_header
      _
    $region3: #{tpu_custom_call.1} parent=1 // loop_header
      %s15 = sphi 0, %s19
      %p16 = scmp.ge.s32.totalorder %s15, 4
      %s23 = sphi 0, %s23
      %s25 = sphi 0, %s23
      %s26 = sphi 0, %s25
      %s40 = sphi 0, %s26
      %s46 = sphi 0, %s48
      %s49 = sphi 0, %s46
      %s50 = sphi 0, %s49
      %s66 = sphi 0, %s50
      %s72 = sphi 0, %s74
      %s75 = sphi 0, %s72
      %s76 = sphi 0, %s75
      %s92 = sphi 0, %s76
      %s98 = sphi 0, %s100
      %s101 = sphi 0, %s98
      %s102 = sphi 0, %s101
      %s118 = sphi 0, %s102
      %s124 = sphi 0, %s126
      %s127 = sphi 0, %s124
      %s128 = sphi 0, %s127
      %s144 = sphi 0, %s128
      %s150 = sphi 0, %s152
      %s153 = sphi 0, %s150
      %s154 = sphi 0, %s153
      %s170 = sphi 0, %s154
    $region4: #{tpu_custom_call.1} parent=1 // loop_header_branch
      %18 = sbr.rel (%p16) target = $region8
    $region5: #{tpu_custom_call.1} parent=1 // loop_body
      %s20 = ssub.s32 %s15, 1
      %s21 = ssub.s32 %s15, 2
      %s22 = sadd.s32 %s15, 1
      %s24 = sadd.s32 %s23, 1
      %p27 = scmp.eq.s32.totalorder %s15, 1
      %p28 = scmp.ne.s32.totalorder %s23, %s25
      %p29 = scmp.eq.s32.totalorder %s15, 0
      %p30 = por %p28, %p29
      %p31 = scmp.ne.s32.totalorder %s23, %s25
      %p32 = scmp.eq.s32.totalorder %s20, 1
      %p33 = por %p31, %p32
      %p34 = scmp.ne.s32.totalorder %s25, %s26
      %p35 = scmp.eq.s32.totalorder %s20, 0
      %p36 = por %p34, %p35
      %p37 = scmp.ne.s32.totalorder %s25, %s26
      %p38 = scmp.eq.s32.totalorder %s21, 1
      %p39 = por %p37, %p38
      %p41 = scmp.ne.s32.totalorder %s26, %s40
      %p42 = scmp.eq.s32.totalorder %s21, 0
      %p43 = por %p41, %p42
      %s44 = ssub.s32 %s15, %s22
      %p45 = scmp.eq.s32.totalorder %s44, 0
      %s47 = sadd.s32 %s46, 1
      %s48 = scalar_select %p45, %s46, %s47
      %p51 = pneg %p45
      %p52 = scmp.eq.s32.totalorder %s15, 1
      %p53 = por %p51, %p52
      %p54 = scmp.ne.s32.totalorder %s46, %s49
      %p55 = scmp.eq.s32.totalorder %s15, 0
      %p56 = por %p54, %p55
      %p57 = scmp.ne.s32.totalorder %s46, %s49
      %p58 = scmp.eq.s32.totalorder %s20, 1
      %p59 = por %p57, %p58
      %p60 = scmp.ne.s32.totalorder %s49, %s50
      %p61 = scmp.eq.s32.totalorder %s20, 0
      %p62 = por %p60, %p61
      %p63 = scmp.ne.s32.totalorder %s49, %s50
      %p64 = scmp.eq.s32.totalorder %s21, 1
      %p65 = por %p63, %p64
      %p67 = scmp.ne.s32.totalorder %s50, %s66
      %p68 = scmp.eq.s32.totalorder %s21, 0
      %p69 = por %p67, %p68
      %s70 = ssub.s32 %s15, %s22
      %p71 = scmp.eq.s32.totalorder %s70, 0
      %s73 = sadd.s32 %s72, 1
      %s74 = scalar_select %p71, %s72, %s73
      %p77 = pneg %p71
      %p78 = scmp.eq.s32.totalorder %s15, 1
      %p79 = por %p77, %p78
      %p80 = scmp.ne.s32.totalorder %s72, %s75
      %p81 = scmp.eq.s32.totalorder %s15, 0
      %p82 = por %p80, %p81
      %p83 = scmp.ne.s32.totalorder %s72, %s75
      %p84 = scmp.eq.s32.totalorder %s20, 1
      %p85 = por %p83, %p84
      %p86 = scmp.ne.s32.totalorder %s75, %s76
      %p87 = scmp.eq.s32.totalorder %s20, 0
      %p88 = por %p86, %p87
      %p89 = scmp.ne.s32.totalorder %s75, %s76
      %p90 = scmp.eq.s32.totalorder %s21, 1
      %p91 = por %p89, %p90
      %p93 = scmp.ne.s32.totalorder %s76, %s92
      %p94 = scmp.eq.s32.totalorder %s21, 0
      %p95 = por %p93, %p94
      %s96 = ssub.s32 %s15, %s22
      %p97 = scmp.eq.s32.totalorder %s96, 0
      %s99 = sadd.s32 %s98, 1
      %s100 = scalar_select %p97, %s98, %s99
      %p103 = pneg %p97
      %p104 = scmp.eq.s32.totalorder %s15, 1
      %p105 = por %p103, %p104
      %p106 = scmp.ne.s32.totalorder %s98, %s101
      %p107 = scmp.eq.s32.totalorder %s15, 0
      %p108 = por %p106, %p107
      %p109 = scmp.ne.s32.totalorder %s98, %s101
      %p110 = scmp.eq.s32.totalorder %s20, 1
      %p111 = por %p109, %p110
      %p112 = scmp.ne.s32.totalorder %s101, %s102
      %p113 = scmp.eq.s32.totalorder %s20, 0
      %p114 = por %p112, %p113
      %p115 = scmp.ne.s32.totalorder %s101, %s102
      %p116 = scmp.eq.s32.totalorder %s21, 1
      %p117 = por %p115, %p116
      %p119 = scmp.ne.s32.totalorder %s102, %s118
      %p120 = scmp.eq.s32.totalorder %s21, 0
      %p121 = por %p119, %p120
      %s122 = ssub.s32 %s15, %s22
      %p123 = scmp.eq.s32.totalorder %s122, 0
      %s125 = sadd.s32 %s124, 1
      %s126 = scalar_select %p123, %s124, %s125
      %p129 = pneg %p123
      %p130 = scmp.eq.s32.totalorder %s15, 1
      %p131 = por %p129, %p130
      %p132 = scmp.ne.s32.totalorder %s124, %s127
      %p133 = scmp.eq.s32.totalorder %s15, 0
      %p134 = por %p132, %p133
      %p135 = scmp.ne.s32.totalorder %s124, %s127
      %p136 = scmp.eq.s32.totalorder %s20, 1
      %p137 = por %p135, %p136
      %p138 = scmp.ne.s32.totalorder %s127, %s128
      %p139 = scmp.eq.s32.totalorder %s20, 0
      %p140 = por %p138, %p139
      %p141 = scmp.ne.s32.totalorder %s127, %s128
      %p142 = scmp.eq.s32.totalorder %s21, 1
      %p143 = por %p141, %p142
      %p145 = scmp.ne.s32.totalorder %s128, %s144
      %p146 = scmp.eq.s32.totalorder %s21, 0
      %p147 = por %p145, %p146
      %s148 = ssub.s32 %s15, %s22
      %p149 = scmp.eq.s32.totalorder %s148, 0
      %s151 = sadd.s32 %s150, 1
      %s152 = scalar_select %p149, %s150, %s151
      %p155 = pneg %p149
      %p156 = scmp.eq.s32.totalorder %s15, 1
      %p157 = por %p155, %p156
      %p158 = scmp.ne.s32.totalorder %s150, %s153
      %p159 = scmp.eq.s32.totalorder %s15, 0
      %p160 = por %p158, %p159
      %p161 = scmp.ne.s32.totalorder %s150, %s153
      %p162 = scmp.eq.s32.totalorder %s20, 1
      %p163 = por %p161, %p162
      %p164 = scmp.ne.s32.totalorder %s153, %s154
      %p165 = scmp.eq.s32.totalorder %s20, 0
      %p166 = por %p164, %p165
      %p167 = scmp.ne.s32.totalorder %s153, %s154
      %p168 = scmp.eq.s32.totalorder %s21, 1
      %p169 = por %p167, %p168
      %p171 = scmp.ne.s32.totalorder %s154, %s170
      %p172 = scmp.eq.s32.totalorder %s21, 0
      %p173 = por %p171, %p172
      %p174 = scmp.le.s32.totalorder 1, %s15
      %p175 = scmp.lt.s32.totalorder %s15, 3
      %p176 = pnand %p174, %p175
      %p177 = pneg %p176
      // Predicated region
      $region9: #{tpu_custom_call.1} parent=5 // pred_check
        _
      $region10: #{tpu_custom_call.1} parent=5 // pred_check_branch
        %179 = sbr.rel (%p176) target = $region12
      $region11: #{tpu_custom_call.1} parent=5 // pred_region
        %s180 = ssub.s32 %s15, 1
        // Predicated region
        $region13: #{tpu_custom_call.1} parent=11 // pred_check
          %p181 = pneg %p36
        $region14: #{tpu_custom_call.1} parent=11 // pred_check_branch
          %183 = sbr.rel (%p181) target = $region16
        $region15: #{tpu_custom_call.1} parent=11 // pred_region
          _
        $region16: #{tpu_custom_call.1} parent=11 // pred_fallthru
          _
      $region12: #{tpu_custom_call.1} parent=5 // pred_fallthru
        _
      %p184 = scmp.lt.s32.totalorder %s15, 2
      // Predicated region
      $region17: #{tpu_custom_call.1} parent=5 // pred_check
        %p185 = pneg %p184
      $region18: #{tpu_custom_call.1} parent=5 // pred_check_branch
        %187 = sbr.rel (%p185) target = $region20
      $region19: #{tpu_custom_call.1} parent=5 // pred_region
        // Predicated region
        $region21: #{tpu_custom_call.1} parent=19 // pred_check
          %p188 = pneg %p56
        $region22: #{tpu_custom_call.1} parent=19 // pred_check_branch
          %190 = sbr.rel (%p188) target = $region24
        $region23: #{tpu_custom_call.1} parent=19 // pred_region
          %p191 = scmp.lt.s32.totalorder %s15, 1
          %s192 = scalar_select %p191, %s15, 1
          %s193 = smul.addr %s192, 2
          %s194 = smul.addr %s193, 4
          %s195 = scalar_lea.vmem %s1, %s194
        $region24: #{tpu_custom_call.1} parent=19 // pred_fallthru
          _
        // Predicated region
        $region25: #{tpu_custom_call.1} parent=19 // pred_check
          %p196 = pneg %p82
        $region26: #{tpu_custom_call.1} parent=19 // pred_check_branch
          %198 = sbr.rel (%p196) target = $region28
        $region27: #{tpu_custom_call.1} parent=19 // pred_region
          %p199 = scmp.lt.s32.totalorder %s15, 1
          %s200 = scalar_select %p199, %s15, 1
          %s201 = smul.addr %s200, 16
          %s202 = smul.addr %s201, 4
          %s203 = scalar_lea.vmem %s2, %s202
        $region28: #{tpu_custom_call.1} parent=19 // pred_fallthru
          _
        // Predicated region
        $region29: #{tpu_custom_call.1} parent=19 // pred_check
          %p204 = pneg %p108
        $region30: #{tpu_custom_call.1} parent=19 // pred_check_branch
          %206 = sbr.rel (%p204) target = $region32
        $region31: #{tpu_custom_call.1} parent=19 // pred_region
          %p207 = scmp.lt.s32.totalorder %s15, 1
          %s208 = scalar_select %p207, %s15, 1
          %s209 = smul.addr %s208, 2
          %s210 = smul.addr %s209, 8
          %s211 = scalar_lea.vmem %s3, %s210
        $region32: #{tpu_custom_call.1} parent=19 // pred_fallthru
          _
        // Predicated region
        $region33: #{tpu_custom_call.1} parent=19 // pred_check
          %p212 = pneg %p134
        $region34: #{tpu_custom_call.1} parent=19 // pred_check_branch
          %214 = sbr.rel (%p212) target = $region36
        $region35: #{tpu_custom_call.1} parent=19 // pred_region
          %p215 = scmp.lt.s32.totalorder %s15, 1
          %s216 = scalar_select %p215, %s15, 1
          %s217 = smul.addr %s216, 16
          %s218 = smul.addr %s217, 4
          %s219 = scalar_lea.vmem %s4, %s218
        $region36: #{tpu_custom_call.1} parent=19 // pred_fallthru
          _
      $region20: #{tpu_custom_call.1} parent=5 // pred_fallthru
        _
      %p220 = scmp.le.s32.totalorder 1, %s15
      %p221 = scmp.lt.s32.totalorder %s15, 3
      %p222 = pnand %p220, %p221
      %p223 = pneg %p222
      // Predicated region
      $region37: #{tpu_custom_call.1} parent=5 // pred_check
        _
      $region38: #{tpu_custom_call.1} parent=5 // pred_check_branch
        %225 = sbr.rel (%p222) target = $region40
      $region39: #{tpu_custom_call.1} parent=5 // pred_region
        %s226 = ssub.s32 %s15, 1
        %p227 = pneg %p36
        %p228 = pneg %p33
        %p229 = scmp.lt.s32.totalorder %s20, 1
        %s230 = scalar_select %p229, %s20, 1
        %s231 = smul.addr %s230, 2
        %s232 = smul.addr %s231, 4
        %s233 = scalar_lea.vmem %s1, %s232
        %p234 = pneg %p62
        %p235 = pneg %p59
        %p236 = scmp.lt.s32.totalorder %s20, 1
        %s237 = scalar_select %p236, %s20, 1
        %s238 = smul.addr %s237, 16
        %s239 = smul.addr %s238, 4
        %s240 = scalar_lea.vmem %s2, %s239
        %p241 = pneg %p88
        %p242 = pneg %p85
        %p243 = scmp.lt.s32.totalorder %s20, 1
        %s244 = scalar_select %p243, %s20, 1
        %s245 = smul.addr %s244, 2
        %s246 = smul.addr %s245, 8
        %s247 = scalar_lea.vmem %s3, %s246
        %p248 = pneg %p114
        %p249 = pneg %p111
        %p250 = scmp.lt.s32.totalorder %s20, 1
        %s251 = scalar_select %p250, %s20, 1
        %s252 = smul.addr %s251, 16
        %s253 = smul.addr %s252, 4
        %s254 = scalar_lea.vmem %s4, %s253
        %p255 = pneg %p140
        %p256 = pneg %p137
        %p257 = pneg %p166
        %p258 = pneg %p163
        %s259 = sand.u32 %s153, 1
        %s260 = scalar_lea.sflag [#allocation4], %s259
        %s261 = sand.u32 %s153, 1
        %s262 = smul.addr %s261, 8
        %s263 = scalar_lea.vmem [#allocation3], %s262
        %p264 = scmp.lt.s32.totalorder %s20, 1
        %s265 = scalar_select %p264, %s20, 1
        %s266 = smul.addr %s265, 2
        %s267 = smul.addr %s266, 4
        %s268 = scalar_lea.vmem %s1, %s267
        %p269 = scmp.lt.s32.totalorder %s20, 1
        %s270 = scalar_select %p269, %s20, 1
        %s271 = smul.addr %s270, 16
        %s272 = smul.addr %s271, 4
        %s273 = scalar_lea.vmem %s2, %s272
        %p274 = scmp.lt.s32.totalorder %s20, 1
        %s275 = scalar_select %p274, %s20, 1
        %s276 = smul.addr %s275, 2
        %s277 = smul.addr %s276, 8
        %s278 = scalar_lea.vmem %s3, %s277
        %p279 = scmp.lt.s32.totalorder %s20, 1
        %s280 = scalar_select %p279, %s20, 1
        %s281 = smul.addr %s280, 16
        %s282 = smul.addr %s281, 4
        %s283 = scalar_lea.vmem %s4, %s282
        %s285 = sld [smem:[#allocation2]]
        %v286 = vld [vmem:[%s273] sm:$0xf]
        %v287 = vld [vmem:[%s273 + $0x4] sm:$0xf]
        %v288 = vld [vmem:[%s273 + $0x8] sm:$0xf]
        %v289 = vld [vmem:[%s273 + $0xc] sm:$0xf]
        %v290 = vld [vmem:[%s273 + $0x10] sm:$0xf]
        %v291 = vld [vmem:[%s273 + $0x14] sm:$0xf]
        %v292 = vld [vmem:[%s273 + $0x18] sm:$0xf]
        %v293 = vld [vmem:[%s273 + $0x1c] sm:$0xf]
        %v294 = vld [vmem:[%s273 + $0x20] sm:$0xf]
        %v295 = vld [vmem:[%s273 + $0x24] sm:$0xf]
        %v296 = vld [vmem:[%s273 + $0x28] sm:$0xf]
        %v297 = vld [vmem:[%s273 + $0x2c] sm:$0xf]
        %v298 = vld [vmem:[%s273 + $0x30] sm:$0xf]
        %v299 = vld [vmem:[%s273 + $0x34] sm:$0xf]
        %v300 = vld [vmem:[%s273 + $0x38] sm:$0xf]
        %v301 = vld [vmem:[%s273 + $0x3c] sm:$0xf]
        %v302 = vld [vmem:[%s278] sm:$0xff]
        %v303 = vld [vmem:[%s278 + $0x8] sm:$0xff]
        %v304 = vlaneseq
        %v305 = vand.u32 %v304, 127
        %306 = vset.pattern.permute.xlu0 0
        %307 = vperm.xlu0 %306, %v302
        %v308 = vpop.permute.xlu0 %307
        %309 = vset.pattern.permute.xlu0 0
        %310 = vperm.xlu0 %309, %v303
        %v311 = vpop.permute.xlu0 %310
        %vm312 = vcmp.eq.s32.totalorder %v305, %v308
        %vm313 = vcmp.eq.s32.totalorder %v305, %v311
        %v314 = vsel %vm312, 1.0, 0.0
        %v315 = vsel %vm313, 1.0, 0.0
        %v316 = vpack.c.bf16 %v315, %v314
        %v333 = vunpack.c.l.b16 %v286
        %v334 = vunpack.c.l.b16 %v287
        %v335 = vunpack.c.l.b16 %v288
        %v336 = vunpack.c.l.b16 %v289
        %v337 = vunpack.c.l.b16 %v290
        %v338 = vunpack.c.l.b16 %v291
        %v339 = vunpack.c.l.b16 %v292
        %v340 = vunpack.c.l.b16 %v293
        %v341 = vunpack.c.l.b16 %v294
        %v342 = vunpack.c.l.b16 %v295
        %v343 = vunpack.c.l.b16 %v296
        %v344 = vunpack.c.l.b16 %v297
        %v345 = vunpack.c.l.b16 %v298
        %v346 = vunpack.c.l.b16 %v299
        %v347 = vunpack.c.l.b16 %v300
        %v348 = vunpack.c.l.b16 %v301
        %v349 = vpack.c.b16 %v334, %v333
        %v350 = vpack.c.b16 %v336, %v335
        %v351 = vpack.c.b16 %v338, %v337
        %v352 = vpack.c.b16 %v340, %v339
        %v353 = vpack.c.b16 %v342, %v341
        %v354 = vpack.c.b16 %v344, %v343
        %v355 = vpack.c.b16 %v346, %v345
        %v356 = vpack.c.b16 %v348, %v347
        %vm357 = vcmask 130048
        %v359 = vsel %vm357, %v349, 0
        %v362 = vsel %vm357, %v350, 0
        %v365 = vsel %vm357, %v351, 0
        %v368 = vsel %vm357, %v352, 0
        %v371 = vsel %vm357, %v353, 0
        %v374 = vsel %vm357, %v354, 0
        %v377 = vsel %vm357, %v355, 0
        %v380 = vsel %vm357, %v356, 0
        %382 = vmatprep.subr.bf16.mxu0 0
        %383 = vmatpush1.bf16.msra.mxu0 %v316
        %384 = vmatprep.subr.bf16.mxu0 0
        %385 = vmatpush1.bf16.msra.mxu0 0
        %386 = vmatprep.subr.bf16.mxu0 0
        %387 = vmatpush1.bf16.msra.mxu0 0
        %388 = vmatprep.subr.bf16.mxu0 0
        %389 = vmatpush1.bf16.msra.mxu0 0
        %390 = vmatprep.subr.bf16.mxu0 0
        %391 = vmatpush1.bf16.msra.mxu0 0
        %392 = vmatprep.subr.bf16.mxu0 0
        %393 = vmatpush1.bf16.msra.mxu0 0
        %394 = vmatprep.subr.bf16.mxu0 0
        %395 = vmatpush1.bf16.msra.mxu0 0
        %396 = vmatprep.subr.bf16.mxu0 0
        %397 = vmatpush1.bf16.msra.mxu0 0
        %398 = vmatprep.subr.bf16.mxu0 0
        %399 = vmatpush1.bf16.msra.mxu0 0
        %400 = vmatprep.subr.bf16.mxu0 0
        %401 = vmatpush1.bf16.msra.mxu0 0
        %402 = vmatprep.subr.bf16.mxu0 0
        %403 = vmatpush1.bf16.msra.mxu0 0
        %404 = vmatprep.subr.bf16.mxu0 0
        %405 = vmatpush1.bf16.msra.mxu0 0
        %406 = vmatprep.subr.bf16.mxu0 0
        %407 = vmatpush1.bf16.msra.mxu0 0
        %408 = vmatprep.subr.bf16.mxu0 0
        %409 = vmatpush1.bf16.msra.mxu0 0
        %410 = vmatprep.subr.bf16.mxu0 0
        %411 = vmatpush1.bf16.msra.mxu0 0
        %412 = vmatprep.subr.bf16.mxu0 0
        %413 = vmatpush1.bf16.msra.mxu0 0
        %414 = vmatprep.mubr.bf16.mxu0 0
        %415 = vmatmul.mubr.bf16.gmra.mrb[0].mxu0 %v359
        %v416 = vpop.f32.mrb[0].mxu0
        %v417 = vadd.f32 0.0, %v416
        %v418 = vpop.f32.mrb[0].mxu0
        %v419 = vpop.f32.mrb[0].mxu0
        %v420 = vadd.f32 0.0, %v419
        %v421 = vpop.f32.mrb[0].mxu0
        %422 = vmatprep.mubr.bf16.mxu0 0
        %423 = vmatmul.mubr.bf16.gmra.mrb[0].mxu0 %v362
        %v424 = vpop.f32.mrb[0].mxu0
        %v425 = vadd.f32 0.0, %v424
        %v426 = vpop.f32.mrb[0].mxu0
        %v427 = vpop.f32.mrb[0].mxu0
        %v428 = vadd.f32 0.0, %v427
        %v429 = vpop.f32.mrb[0].mxu0
        %430 = vmatprep.mubr.bf16.mxu0 0
        %431 = vmatmul.mubr.bf16.gmra.mrb[0].mxu0 %v365
        %v432 = vpop.f32.mrb[0].mxu0
        %v433 = vadd.f32 0.0, %v432
        %v434 = vpop.f32.mrb[0].mxu0
        %v435 = vpop.f32.mrb[0].mxu0
        %v436 = vadd.f32 0.0, %v435
        %v437 = vpop.f32.mrb[0].mxu0
        %438 = vmatprep.mubr.bf16.mxu0 0
        %439 = vmatmul.mubr.bf16.gmra.mrb[0].mxu0 %v368
        %v440 = vpop.f32.mrb[0].mxu0
        %v441 = vadd.f32 0.0, %v440
        %v442 = vpop.f32.mrb[0].mxu0
        %v443 = vpop.f32.mrb[0].mxu0
        %v444 = vadd.f32 0.0, %v443
        %v445 = vpop.f32.mrb[0].mxu0
        %446 = vmatprep.mubr.bf16.mxu0 0
        %447 = vmatmul.mubr.bf16.gmra.mrb[0].mxu0 %v371
        %v448 = vpop.f32.mrb[0].mxu0
        %v449 = vadd.f32 0.0, %v448
        %v450 = vpop.f32.mrb[0].mxu0
        %v451 = vpop.f32.mrb[0].mxu0
        %v452 = vadd.f32 0.0, %v451
        %v453 = vpop.f32.mrb[0].mxu0
        %454 = vmatprep.mubr.bf16.mxu0 0
        %455 = vmatmul.mubr.bf16.gmra.mrb[0].mxu0 %v374
        %v456 = vpop.f32.mrb[0].mxu0
        %v457 = vadd.f32 0.0, %v456
        %v458 = vpop.f32.mrb[0].mxu0
        %v459 = vpop.f32.mrb[0].mxu0
        %v460 = vadd.f32 0.0, %v459
        %v461 = vpop.f32.mrb[0].mxu0
        %462 = vmatprep.mubr.bf16.mxu0 0
        %463 = vmatmul.mubr.bf16.gmra.mrb[0].mxu0 %v377
        %v464 = vpop.f32.mrb[0].mxu0
        %v465 = vadd.f32 0.0, %v464
        %v466 = vpop.f32.mrb[0].mxu0
        %v467 = vpop.f32.mrb[0].mxu0
        %v468 = vadd.f32 0.0, %v467
        %v469 = vpop.f32.mrb[0].mxu0
        %470 = vmatprep.mubr.bf16.mxu0 0
        %471 = vmatmul.mubr.bf16.gmra.mrb[0].mxu0 %v380
        %v472 = vpop.f32.mrb[0].mxu0
        %v473 = vadd.f32 0.0, %v472
        %v474 = vpop.f32.mrb[0].mxu0
        %v475 = vpop.f32.mrb[0].mxu0
        %v476 = vadd.f32 0.0, %v475
        %v477 = vpop.f32.mrb[0].mxu0
        %478 = vdwg.mxu0
        %s479 = ssub.f32 1.0, %s285
        %s480 = smul.f32 %s479, 0.5
        %v481 = vadd.f32 %v433, 0.0001
        %v482 = vstv %s480
        %v483 = vrcp.pop %v481
        %v484 = vmul.f32 %v482, %v483
        %v485 = vlaneseq
        %v486 = vshrl.u32 %v485, 7
        %v487 = vsub.s32 0, %v486
        %v488 = vrot.slane %v484, %v487
        %v489 = vmul.f32 %v417, %v488
        %v490 = vmul.f32 %v420, %v488
        %v491 = vmul.f32 %v425, %v488
        %v492 = vmul.f32 %v428, %v488
        %v493 = vmul.f32 %v433, %v488
        %v494 = vmul.f32 %v436, %v488
        %v495 = vmul.f32 %v441, %v488
        %v496 = vmul.f32 %v444, %v488
        %v497 = vmul.f32 %v449, %v488
        %v498 = vmul.f32 %v452, %v488
        %v499 = vmul.f32 %v457, %v488
        %v500 = vmul.f32 %v460, %v488
        %v501 = vmul.f32 %v465, %v488
        %v502 = vmul.f32 %v468, %v488
        %v503 = vmul.f32 %v473, %v488
        %v504 = vmul.f32 %v476, %v488
        %s505 = smul.f32 %s285, 0.5
        %v506 = vld [vmem:[%s283] sm:$0xf]
        %v507 = vld [vmem:[%s283 + $0x4] sm:$0xf]
        %v508 = vld [vmem:[%s283 + $0x8] sm:$0xf]
        %v509 = vld [vmem:[%s283 + $0xc] sm:$0xf]
        %v510 = vld [vmem:[%s283 + $0x10] sm:$0xf]
        %v511 = vld [vmem:[%s283 + $0x14] sm:$0xf]
        %v512 = vld [vmem:[%s283 + $0x18] sm:$0xf]
        %v513 = vld [vmem:[%s283 + $0x1c] sm:$0xf]
        %v514 = vld [vmem:[%s283 + $0x20] sm:$0xf]
        %v515 = vld [vmem:[%s283 + $0x24] sm:$0xf]
        %v516 = vld [vmem:[%s283 + $0x28] sm:$0xf]
        %v517 = vld [vmem:[%s283 + $0x2c] sm:$0xf]
        %v518 = vld [vmem:[%s283 + $0x30] sm:$0xf]
        %v519 = vld [vmem:[%s283 + $0x34] sm:$0xf]
        %v520 = vld [vmem:[%s283 + $0x38] sm:$0xf]
        %v521 = vld [vmem:[%s283 + $0x3c] sm:$0xf]
        %v522 = vunpack.c.l.bf16 %v506
        %v523 = vunpack.c.l.bf16 %v507
        %v524 = vunpack.c.l.bf16 %v508
        %v525 = vunpack.c.l.bf16 %v509
        %v526 = vunpack.c.l.bf16 %v510
        %v527 = vunpack.c.l.bf16 %v511
        %v528 = vunpack.c.l.bf16 %v512
        %v529 = vunpack.c.l.bf16 %v513
        %v530 = vunpack.c.l.bf16 %v514
        %v531 = vunpack.c.l.bf16 %v515
        %v532 = vunpack.c.l.bf16 %v516
        %v533 = vunpack.c.l.bf16 %v517
        %v534 = vunpack.c.l.bf16 %v518
        %v535 = vunpack.c.l.bf16 %v519
        %v536 = vunpack.c.l.bf16 %v520
        %v537 = vunpack.c.l.bf16 %v521
        %v538 = vstv %s505
        %v539 = vmul.f32 %v538, %v522
        %v540 = vmul.f32 %v538, %v523
        %v541 = vmul.f32 %v538, %v524
        %v542 = vmul.f32 %v538, %v525
        %v543 = vmul.f32 %v538, %v526
        %v544 = vmul.f32 %v538, %v527
        %v545 = vmul.f32 %v538, %v528
        %v546 = vmul.f32 %v538, %v529
        %v547 = vmul.f32 %v538, %v530
        %v548 = vmul.f32 %v538, %v531
        %v549 = vmul.f32 %v538, %v532
        %v550 = vmul.f32 %v538, %v533
        %v551 = vmul.f32 %v538, %v534
        %v552 = vmul.f32 %v538, %v535
        %v553 = vmul.f32 %v538, %v536
        %v554 = vmul.f32 %v538, %v537
        %v555 = vadd.f32 %v489, %v539
        %v556 = vadd.f32 %v490, %v540
        %v557 = vadd.f32 %v491, %v541
        %v558 = vadd.f32 %v492, %v542
        %v559 = vadd.f32 %v493, %v543
        %v560 = vadd.f32 %v494, %v544
        %v561 = vadd.f32 %v495, %v545
        %v562 = vadd.f32 %v496, %v546
        %v563 = vadd.f32 %v497, %v547
        %v564 = vadd.f32 %v498, %v548
        %v565 = vadd.f32 %v499, %v549
        %v566 = vadd.f32 %v500, %v550
        %v567 = vadd.f32 %v501, %v551
        %v568 = vadd.f32 %v502, %v552
        %v569 = vadd.f32 %v503, %v553
        %v570 = vadd.f32 %v504, %v554
        %v571 = vld [vmem:[%s268] sm:$0xf]
        %v572 = vld [vmem:[%s268 + $0x4] sm:$0xf]
        %v573 = vunpack.c.l.bf16 %v571
        %v574 = vunpack.c.l.bf16 %v572
        %v575 = vadd.f32 %v573, %v574
        %576 = vmatprep.subr.mxu0 0.0
        %577 = vmatpush1.msra.mxu0 %v555
        %578 = vmatprep.subr.mxu0 0.0
        %579 = vmatpush1.msra.mxu0 %v556
        %580 = vmatprep.subr.mxu0 0.0
        %581 = vmatpush1.msra.mxu0 %v557
        %582 = vmatprep.subr.mxu0 0.0
        %583 = vmatpush1.msra.mxu0 %v558
        %584 = vmatprep.subr.mxu0 0.0
        %585 = vmatpush1.msra.mxu0 %v559
        %586 = vmatprep.subr.mxu0 0.0
        %587 = vmatpush1.msra.mxu0 %v560
        %588 = vmatprep.subr.mxu0 0.0
        %589 = vmatpush1.msra.mxu0 %v561
        %590 = vmatprep.subr.mxu0 0.0
        %591 = vmatpush1.msra.mxu0 %v562
        %592 = vmatprep.subr.mxu0 0.0
        %593 = vmatpush1.msra.mxu0 %v563
        %594 = vmatprep.subr.mxu0 0.0
        %595 = vmatpush1.msra.mxu0 %v564
        %596 = vmatprep.subr.mxu0 0.0
        %597 = vmatpush1.msra.mxu0 %v565
        %598 = vmatprep.subr.mxu0 0.0
        %599 = vmatpush1.msra.mxu0 %v566
        %600 = vmatprep.subr.mxu0 0.0
        %601 = vmatpush1.msra.mxu0 %v567
        %602 = vmatprep.subr.mxu0 0.0
        %603 = vmatpush1.msra.mxu0 %v568
        %604 = vmatprep.subr.mxu0 0.0
        %605 = vmatpush1.msra.mxu0 %v569
        %606 = vmatprep.subr.mxu0 0.0
        %607 = vmatpush1.msra.mxu0 %v570
        %608 = vmatprep.subr.mxu0 0.0
        %609 = vmatpush1.msra.mxu0 0.0
        %610 = vmatprep.subr.mxu0 0.0
        %611 = vmatpush1.msra.mxu0 0.0
        %612 = vmatprep.subr.mxu0 0.0
        %613 = vmatpush1.msra.mxu0 0.0
        %614 = vmatprep.subr.mxu0 0.0
        %615 = vmatpush1.msra.mxu0 0.0
        %616 = vmatprep.subr.mxu0 0.0
        %617 = vmatpush1.msra.mxu0 0.0
        %618 = vmatprep.subr.mxu0 0.0
        %619 = vmatpush1.msra.mxu0 0.0
        %620 = vmatprep.subr.mxu0 0.0
        %621 = vmatpush1.msra.mxu0 0.0
        %622 = vmatprep.subr.mxu0 0.0
        %623 = vmatpush1.msra.mxu0 0.0
        %624 = vmatprep.subr.mxu0 0.0
        %625 = vmatpush1.msra.mxu0 0.0
        %626 = vmatprep.subr.mxu0 0.0
        %627 = vmatpush1.msra.mxu0 0.0
        %628 = vmatprep.subr.mxu0 0.0
        %629 = vmatpush1.msra.mxu0 0.0
        %630 = vmatprep.subr.mxu0 0.0
        %631 = vmatpush1.msra.mxu0 0.0
        %632 = vmatprep.subr.mxu0 0.0
        %633 = vmatpush1.msra.mxu0 0.0
        %634 = vmatprep.subr.mxu0 0.0
        %635 = vmatpush1.msra.mxu0 0.0
        %636 = vmatprep.subr.mxu0 0.0
        %637 = vmatpush1.msra.mxu0 0.0
        %638 = vmatprep.subr.mxu0 0.0
        %639 = vmatpush1.msra.mxu0 0.0
        %640 = vmatprep.mubr.f32.mxu0 0.0
        %641 = vmatmul.mubr.f32.gmra.mrb[0].mxu0 %v575
        %v642 = vpop.f32.mrb[0].mxu0
        %v643 = vadd.f32 0.0, %v642
        %v644 = vpop.f32.mrb[0].mxu0
        %645 = vdwg.mxu0
        %646 = vst [vmem:[%s263] sm:$0xff] %v643
        %s647 = sand.u32 %s153, 1
        %s648 = scalar_lea.sflag [#allocation4], %s647
        %s649 = sand.u32 %s153, 1
        %s650 = smul.addr %s649, 8
        %s651 = scalar_lea.vmem [#allocation3], %s650
        // Predicated region
        $region41: #{tpu_custom_call.1} parent=39 // pred_check
          %p652 = pneg %p163
        $region42: #{tpu_custom_call.1} parent=39 // pred_check_branch
          %654 = sbr.rel (%p652) target = $region44
        $region43: #{tpu_custom_call.1} parent=39 // pred_region
          %s656 = ssub.s32 128, 128
          %657 = vsyncadd %s648, %s656
          %s658 = smul.addr %s20, 128
          %s659 = scalar_lea.hbm %s5, %s658
          %s661 = sshll.u32 %s651, 4
          %s662 = int_to_ptr.vmem [resolvable:$true] %s661
          %664 = dma.vmem_to_hbm [thread:$0]  %s662, 128, %s659, %s648
        $region44: #{tpu_custom_call.1} parent=39 // pred_fallthru
          _
      $region40: #{tpu_custom_call.1} parent=5 // pred_fallthru
        _
      %p665 = scmp.le.s32.totalorder 2, %s15
      // Predicated region
      $region45: #{tpu_custom_call.1} parent=5 // pred_check
        %p666 = pneg %p665
      $region46: #{tpu_custom_call.1} parent=5 // pred_check_branch
        %668 = sbr.rel (%p666) target = $region48
      $region47: #{tpu_custom_call.1} parent=5 // pred_region
        %s669 = ssub.s32 %s15, 2
        // Predicated region
        $region49: #{tpu_custom_call.1} parent=47 // pred_check
          %p670 = pneg %p169
        $region50: #{tpu_custom_call.1} parent=47 // pred_check_branch
          %672 = sbr.rel (%p670) target = $region52
        $region51: #{tpu_custom_call.1} parent=47 // pred_region
          %s673 = sand.u32 %s154, 1
          %s674 = scalar_lea.sflag [#allocation4], %s673
          %s675 = sand.u32 %s154, 1
          %s676 = smul.addr %s675, 8
          %s677 = scalar_lea.vmem [#allocation3], %s676
          %678 = dma.done %s674, 128
        $region52: #{tpu_custom_call.1} parent=47 // pred_fallthru
          _
      $region48: #{tpu_custom_call.1} parent=5 // pred_fallthru
        _
    $region6: #{tpu_custom_call.1} parent=1 // loop_footer
      %s19 = sadd.s32 1, %s15
    $region7: #{tpu_custom_call.1} parent=1 // loop_footer_branch
      %14 = sbr.rel target = $region3
    $region8: #{tpu_custom_call.1} parent=1 // loop_exit
      _
    %679 = vsyncpa [#allocation4], 1
    %s680 = scalar_lea.sflag [#allocation4], 1
    %681 = vsyncpa %s680, 1

</llo_original>
